<compile_context>
chip_gen: v7x
topology: tpu7x:2x2x1
jax: 0.10.0
libtpu: 0.0.40
codegen_flags: <defaults>
</compile_context>

<pallas_src>
import functools

import jax
import jax.numpy as jnp
from jax.experimental import pallas as pl
from jax.experimental.pallas import tpu as pltpu


def _fused_vgg_kernel(x_ref, w1_ref, b1_ref, w2_ref, b2_ref, shift_ref, o_ref,
                      *, shift1_input, shift2_input):
    # x_ref    : (1, H, W*Cin)       one image, NHWC with (W, C) folded into the lane dim
    # w1_ref   : (3, W*Cin, W*Cmid)  banded conv1 weights, one slab per kh row-tap
    # b1_ref   : (1, W*Cmid)         conv1 bias tiled across W
    # w2_ref   : (3, W*Cmid, W*Cout)
    # b2_ref   : (1, W*Cout)
    # shift_ref: (2, H, H)           [0]=shift-rows-down matrix, [1]=shift-rows-up matrix
    # o_ref    : (1, H, W*Cout)
    f32 = jnp.float32
    sdn = shift_ref[0]  # (sdn @ a)[h] = a[h-1], row 0 -> 0  (zero halo at the top)
    sup = shift_ref[1]  # (sup @ a)[h] = a[h+1], last row -> 0 (zero halo at the bottom)

    def conv3x3_bias_relu(a, w_ref, b_ref, shift_input):
        # a: (H, W*Ci) -> (H, W*Co).  Tap kh=0 needs input row h-1, kh=2 needs row h+1.
        # Shift the narrower operand (static choice): (sdn@a)@w0 == sdn@(a@w0).
        if shift_input:
            a_dn = jnp.dot(sdn, a, preferred_element_type=f32)
            a_up = jnp.dot(sup, a, preferred_element_type=f32)
            out = (jnp.dot(a, w_ref[1], preferred_element_type=f32)
                   + jnp.dot(a_dn, w_ref[0], preferred_element_type=f32)
                   + jnp.dot(a_up, w_ref[2], preferred_element_type=f32))
        else:
            t0 = jnp.dot(a, w_ref[0], preferred_element_type=f32)
            t1 = jnp.dot(a, w_ref[1], preferred_element_type=f32)
            t2 = jnp.dot(a, w_ref[2], preferred_element_type=f32)
            out = (t1
                   + jnp.dot(sdn, t0, preferred_element_type=f32)
                   + jnp.dot(sup, t2, preferred_element_type=f32))
        # bias add + act_func (ReLU); DropBlock_search = identity at eval.
        return jnp.maximum(out + b_ref[...], 0.0)

    x = x_ref[0].astype(f32)                                     # (H, W*Cin)
    h1 = conv3x3_bias_relu(x, w1_ref, b1_ref, shift1_input)      # conv1 -> dropout1 -> ReLU
    h2 = conv3x3_bias_relu(h1, w2_ref, b2_ref, shift2_input)     # conv2 -> dropout2 -> ReLU
    o_ref[...] = h2[None].astype(o_ref.dtype)                    # lane-dense store


def _banded_weights(w_hwio, W):
    """Build per-kh banded weight slabs (host-side, once).

    w_hwio: (3, 3, Ci, Co) HWIO conv weights.  Returns (3, W*Ci, W*Co) with
      R[kh, w_in*Ci + ci, w_out*Co + co] = w[kh, w_in - w_out + 1, ci, co]
    when 0 <= w_in - w_out + 1 < 3, else 0.  Multiplying the (H, W*Ci) activation block by
    R[kh] applies all three kw taps of row-offset kh in one matmul; the W-direction zero
    padding falls out of the band's boundary truncation.
    """
    _, _, Ci, Co = w_hwio.shape
    w_in = jnp.arange(W)[:, None]
    w_out = jnp.arange(W)[None, :]
    kw = w_in - w_out + 1                                      # (W, W)
    valid = (kw >= 0) & (kw <= 2)
    g = w_hwio[:, jnp.clip(kw, 0, 2), :, :]                    # (3, W_in, W_out, Ci, Co)
    g = g * valid[None, :, :, None, None].astype(w_hwio.dtype)
    g = jnp.transpose(g, (0, 1, 3, 2, 4))                      # (3, W_in, Ci, W_out, Co)
    return g.reshape(3, W * Ci, W * Co)


def _shift_mats(H, dtype=jnp.float32):
    """(2, H, H): [0] shifts rows down by one (top row -> 0), [1] shifts rows up by one."""
    r = jnp.arange(H)[:, None]
    c = jnp.arange(H)[None, :]
    sdn = (r == c + 1).astype(dtype)
    sup = (c == r + 1).astype(dtype)
    return jnp.stack([sdn, sup])


def bayesdown_vggblock_forward_nhwc(x_nhwc, params):
    """x_nhwc: (N, H, W, Cin)  ->  (N, H, W, Cout)."""
    N, H, W, Cin = x_nhwc.shape
    w1, b1, w2, b2 = params["w1"], params["b1"], params["w2"], params["b2"]
    Cmid, Cout = w1.shape[-1], w2.shape[-1]

    x2d = x_nhwc.reshape(N, H, W * Cin)              # free reshape: channels fold into lanes
    w1b = _banded_weights(w1, W)                     # (3, W*Cin,  W*Cmid)
    w2b = _banded_weights(w2, W)                     # (3, W*Cmid, W*Cout)
    b1r = jnp.tile(b1, W).reshape(1, W * Cmid)
    b2r = jnp.tile(b2, W).reshape(1, W * Cout)
    shifts = _shift_mats(H, jnp.float32)             # (2, H, H)

    kernel = functools.partial(_fused_vgg_kernel,
                               shift1_input=(Cin <= Cmid),   # shift the narrower side
                               shift2_input=(Cmid <= Cout))

    out2d = pl.pallas_call(
        kernel,
        out_shape=jax.ShapeDtypeStruct((N, H, W * Cout), x_nhwc.dtype),
        grid_spec=pltpu.PrefetchScalarGridSpec(
            num_scalar_prefetch=0,
            grid=(N,),
            in_specs=[
                pl.BlockSpec((1, H, W * Cin), lambda n: (n, 0, 0)),
                pl.BlockSpec((3, W * Cin, W * Cmid), lambda n: (0, 0, 0)),
                pl.BlockSpec((1, W * Cmid), lambda n: (0, 0)),
                pl.BlockSpec((3, W * Cmid, W * Cout), lambda n: (0, 0, 0)),
                pl.BlockSpec((1, W * Cout), lambda n: (0, 0)),
                pl.BlockSpec((2, H, H), lambda n: (0, 0, 0)),
            ],
            out_specs=pl.BlockSpec((1, H, W * Cout), lambda n: (n, 0, 0)),
        ),
        compiler_params=pltpu.CompilerParams(
            dimension_semantics=("parallel",)),
    )(x2d, w1b, b1r, w2b, b2r, shifts)

    return out2d.reshape(N, H, W, Cout)


def bayesdown_vggblock_forward(x_nchw, params):
    """PyTorch-layout entry point (NCHW in / NCHW out).

    NOTE: if the surrounding model can consume NHWC, call bayesdown_vggblock_forward_nhwc
    directly and skip both transposes (each is a full extra HBM pass done by XLA outside
    the kernel).
    """
    x = jnp.transpose(x_nchw, (0, 2, 3, 1))
    out = bayesdown_vggblock_forward_nhwc(x, params)
    return jnp.transpose(out, (0, 3, 1, 2))


def init_params(key, in_channels, middle_channels, out_channels, dtype=jnp.float32):
    """Deterministic init mimicking PyTorch Conv2d default (uniform +-1/sqrt(fan_in)).
    Weights stored HWIO: (kh, kw, Cin, Cout)."""
    k1, k2, k3, k4 = jax.random.split(key, 4)
    bound1 = 1.0 / jnp.sqrt(in_channels * 9)
    bound2 = 1.0 / jnp.sqrt(middle_channels * 9)
    w1 = jax.random.uniform(k1, (3, 3, in_channels, middle_channels), dtype, -bound1, bound1)
    b1 = jax.random.uniform(k2, (middle_channels,), dtype, -bound1, bound1)
    w2 = jax.random.uniform(k3, (3, 3, middle_channels, out_channels), dtype, -bound2, bound2)
    b2 = jax.random.uniform(k4, (out_channels,), dtype, -bound2, bound2)
    return {"w1": w1, "b1": b1, "w2": w2, "b2": b2}


if __name__ == "__main__":
    key = jax.random.PRNGKey(0)
    kx, kp = jax.random.split(key)

    N, Cin, Cmid, Cout, H, W = 2, 4, 8, 4, 16, 16
    x = jax.random.normal(kx, (N, Cin, H, W), dtype=jnp.float32)
    params = init_params(kp, Cin, Cmid, Cout)

    out = bayesdown_vggblock_forward(x, params)
    out = jax.block_until_ready(out)

    # sanity check against a pure-JAX reference
    def ref_forward(x_nchw, p):
        def conv(x_, w, b):
            w_oihw = jnp.transpose(w, (3, 2, 0, 1))
            y = jax.lax.conv_general_dilated(
                x_, w_oihw, window_strides=(1, 1), padding=((1, 1), (1, 1)))
            return jnp.maximum(y + b[None, :, None, None], 0.0)
        return conv(conv(x_nchw, p["w1"], p["b1"]), p["w2"], p["b2"])

    ref = ref_forward(x, params)
    assert out.shape == (N, Cout, H, W)
    assert jnp.allclose(out, ref, atol=2e-4, rtol=2e-4)
    print("KERNEL_OK")
</pallas_src>

<mosaic_0001>
module attributes {stable_mosaic.version = 11 : i64} {
  func.func @_fused_vgg_kernel(%arg0: i32, %arg1: memref<1x16x64xf32, #tpu.memory_space<vmem>>, %arg2: memref<3x64x128xf32, #tpu.memory_space<vmem>>, %arg3: memref<1x128xf32, #tpu.memory_space<vmem>>, %arg4: memref<3x128x64xf32, #tpu.memory_space<vmem>>, %arg5: memref<1x64xf32, #tpu.memory_space<vmem>>, %arg6: memref<2x16x16xf32, #tpu.memory_space<vmem>>, %arg7: memref<1x16x64xf32, #tpu.memory_space<vmem>>) attributes {dimension_semantics = [#tpu.dimension_semantics<parallel>], iteration_bounds = array<i64: 2>, scalar_prefetch = 0 : i64, scratch_operands = 0 : i64, tpu.core_type = #tpu.core_type<tc>, window_params = [{transform_indices = @transform_0, window_bounds = array<i64: 1, 16, 64>}, {pipeline_mode = #tpu.pipeline_mode<synchronous>, transform_indices = @transform_1, window_bounds = array<i64: 3, 64, 128>}, {pipeline_mode = #tpu.pipeline_mode<synchronous>, transform_indices = @transform_2, window_bounds = array<i64: 1, 128>}, {pipeline_mode = #tpu.pipeline_mode<synchronous>, transform_indices = @transform_3, window_bounds = array<i64: 3, 128, 64>}, {pipeline_mode = #tpu.pipeline_mode<synchronous>, transform_indices = @transform_4, window_bounds = array<i64: 1, 64>}, {pipeline_mode = #tpu.pipeline_mode<synchronous>, transform_indices = @transform_5, window_bounds = array<i64: 2, 16, 16>}, {transform_indices = @transform_6, window_bounds = array<i64: 1, 16, 64>}]} {
    %c0 = arith.constant 0 : index
    %c0_0 = arith.constant 0 : index
    %c0_1 = arith.constant 0 : index
    %0 = vector.load %arg6[%c0, %c0_0, %c0_1] : memref<2x16x16xf32, #tpu.memory_space<vmem>>, vector<1x16x16xf32>
    %1 = vector.shape_cast %0 : vector<1x16x16xf32> to vector<16x16xf32>
    %c1 = arith.constant 1 : index
    %c0_2 = arith.constant 0 : index
    %c0_3 = arith.constant 0 : index
    %2 = vector.load %arg6[%c1, %c0_2, %c0_3] : memref<2x16x16xf32, #tpu.memory_space<vmem>>, vector<1x16x16xf32>
    %3 = vector.shape_cast %2 : vector<1x16x16xf32> to vector<16x16xf32>
    %c0_4 = arith.constant 0 : index
    %c0_5 = arith.constant 0 : index
    %c0_6 = arith.constant 0 : index
    %4 = vector.load %arg1[%c0_4, %c0_5, %c0_6] : memref<1x16x64xf32, #tpu.memory_space<vmem>>, vector<1x16x64xf32>
    %5 = vector.shape_cast %4 : vector<1x16x64xf32> to vector<16x64xf32>
    %cst = arith.constant dense<0.000000e+00> : vector<16x64xf32>
    %6 = tpu.matmul %1, %5, %cst {dimension_numbers = #tpu.dot_dimension_numbers<[1], [0], [0], [1], [0, 0, 1, 1], [], []>} : vector<16x16xf32>, vector<16x64xf32>, vector<16x64xf32> -> vector<16x64xf32>
    %cst_7 = arith.constant dense<0.000000e+00> : vector<16x64xf32>
    %7 = tpu.matmul %3, %5, %cst_7 {dimension_numbers = #tpu.dot_dimension_numbers<[1], [0], [0], [1], [0, 0, 1, 1], [], []>} : vector<16x16xf32>, vector<16x64xf32>, vector<16x64xf32> -> vector<16x64xf32>
    %c1_8 = arith.constant 1 : index
    %c0_9 = arith.constant 0 : index
    %c0_10 = arith.constant 0 : index
    %8 = vector.load %arg2[%c1_8, %c0_9, %c0_10] : memref<3x64x128xf32, #tpu.memory_space<vmem>>, vector<1x64x128xf32>
    %9 = vector.shape_cast %8 : vector<1x64x128xf32> to vector<64x128xf32>
    %cst_11 = arith.constant dense<0.000000e+00> : vector<16x128xf32>
    %10 = tpu.matmul %5, %9, %cst_11 {dimension_numbers = #tpu.dot_dimension_numbers<[1], [0], [0], [1], [0, 0, 1, 1], [], []>} : vector<16x64xf32>, vector<64x128xf32>, vector<16x128xf32> -> vector<16x128xf32>
    %c0_12 = arith.constant 0 : index
    %c0_13 = arith.constant 0 : index
    %c0_14 = arith.constant 0 : index
    %11 = vector.load %arg2[%c0_12, %c0_13, %c0_14] : memref<3x64x128xf32, #tpu.memory_space<vmem>>, vector<1x64x128xf32>
    %12 = vector.shape_cast %11 : vector<1x64x128xf32> to vector<64x128xf32>
    %cst_15 = arith.constant dense<0.000000e+00> : vector<16x128xf32>
    %13 = tpu.matmul %6, %12, %cst_15 {dimension_numbers = #tpu.dot_dimension_numbers<[1], [0], [0], [1], [0, 0, 1, 1], [], []>} : vector<16x64xf32>, vector<64x128xf32>, vector<16x128xf32> -> vector<16x128xf32>
    %14 = arith.addf %10, %13 : vector<16x128xf32>
    %c2 = arith.constant 2 : index
    %c0_16 = arith.constant 0 : index
    %c0_17 = arith.constant 0 : index
    %15 = vector.load %arg2[%c2, %c0_16, %c0_17] : memref<3x64x128xf32, #tpu.memory_space<vmem>>, vector<1x64x128xf32>
    %16 = vector.shape_cast %15 : vector<1x64x128xf32> to vector<64x128xf32>
    %cst_18 = arith.constant dense<0.000000e+00> : vector<16x128xf32>
    %17 = tpu.matmul %7, %16, %cst_18 {dimension_numbers = #tpu.dot_dimension_numbers<[1], [0], [0], [1], [0, 0, 1, 1], [], []>} : vector<16x64xf32>, vector<64x128xf32>, vector<16x128xf32> -> vector<16x128xf32>
    %18 = arith.addf %14, %17 : vector<16x128xf32>
    %c0_19 = arith.constant 0 : index
    %c0_20 = arith.constant 0 : index
    %19 = vector.load %arg3[%c0_19, %c0_20] : memref<1x128xf32, #tpu.memory_space<vmem>>, vector<1x128xf32>
    %20 = vector.broadcast %19 : vector<1x128xf32> to vector<16x128xf32>
    %21 = arith.addf %18, %20 : vector<16x128xf32>
    %cst_21 = arith.constant 0.000000e+00 : f32
    %22 = vector.broadcast %cst_21 : f32 to vector<16x128xf32>
    %23 = arith.maximumf %21, %22 : vector<16x128xf32>
    %c0_22 = arith.constant 0 : index
    %c0_23 = arith.constant 0 : index
    %c0_24 = arith.constant 0 : index
    %24 = vector.load %arg4[%c0_22, %c0_23, %c0_24] : memref<3x128x64xf32, #tpu.memory_space<vmem>>, vector<1x128x64xf32>
    %25 = vector.shape_cast %24 : vector<1x128x64xf32> to vector<128x64xf32>
    %cst_25 = arith.constant dense<0.000000e+00> : vector<16x64xf32>
    %26 = tpu.matmul %23, %25, %cst_25 {dimension_numbers = #tpu.dot_dimension_numbers<[1], [0], [0], [1], [0, 0, 1, 1], [], []>} : vector<16x128xf32>, vector<128x64xf32>, vector<16x64xf32> -> vector<16x64xf32>
    %c1_26 = arith.constant 1 : index
    %c0_27 = arith.constant 0 : index
    %c0_28 = arith.constant 0 : index
    %27 = vector.load %arg4[%c1_26, %c0_27, %c0_28] : memref<3x128x64xf32, #tpu.memory_space<vmem>>, vector<1x128x64xf32>
    %28 = vector.shape_cast %27 : vector<1x128x64xf32> to vector<128x64xf32>
    %cst_29 = arith.constant dense<0.000000e+00> : vector<16x64xf32>
    %29 = tpu.matmul %23, %28, %cst_29 {dimension_numbers = #tpu.dot_dimension_numbers<[1], [0], [0], [1], [0, 0, 1, 1], [], []>} : vector<16x128xf32>, vector<128x64xf32>, vector<16x64xf32> -> vector<16x64xf32>
    %c2_30 = arith.constant 2 : index
    %c0_31 = arith.constant 0 : index
    %c0_32 = arith.constant 0 : index
    %30 = vector.load %arg4[%c2_30, %c0_31, %c0_32] : memref<3x128x64xf32, #tpu.memory_space<vmem>>, vector<1x128x64xf32>
    %31 = vector.shape_cast %30 : vector<1x128x64xf32> to vector<128x64xf32>
    %cst_33 = arith.constant dense<0.000000e+00> : vector<16x64xf32>
    %32 = tpu.matmul %23, %31, %cst_33 {dimension_numbers = #tpu.dot_dimension_numbers<[1], [0], [0], [1], [0, 0, 1, 1], [], []>} : vector<16x128xf32>, vector<128x64xf32>, vector<16x64xf32> -> vector<16x64xf32>
    %cst_34 = arith.constant dense<0.000000e+00> : vector<16x64xf32>
    %33 = tpu.matmul %1, %26, %cst_34 {dimension_numbers = #tpu.dot_dimension_numbers<[1], [0], [0], [1], [0, 0, 1, 1], [], []>} : vector<16x16xf32>, vector<16x64xf32>, vector<16x64xf32> -> vector<16x64xf32>
    %34 = arith.addf %29, %33 : vector<16x64xf32>
    %cst_35 = arith.constant dense<0.000000e+00> : vector<16x64xf32>
    %35 = tpu.matmul %3, %32, %cst_35 {dimension_numbers = #tpu.dot_dimension_numbers<[1], [0], [0], [1], [0, 0, 1, 1], [], []>} : vector<16x16xf32>, vector<16x64xf32>, vector<16x64xf32> -> vector<16x64xf32>
    %36 = arith.addf %34, %35 : vector<16x64xf32>
    %c0_36 = arith.constant 0 : index
    %c0_37 = arith.constant 0 : index
    %37 = vector.load %arg5[%c0_36, %c0_37] : memref<1x64xf32, #tpu.memory_space<vmem>>, vector<1x64xf32>
    %38 = vector.broadcast %37 : vector<1x64xf32> to vector<16x64xf32>
    %39 = arith.addf %36, %38 : vector<16x64xf32>
    %cst_38 = arith.constant 0.000000e+00 : f32
    %40 = vector.broadcast %cst_38 : f32 to vector<16x64xf32>
    %41 = arith.maximumf %39, %40 : vector<16x64xf32>
    %42 = vector.shape_cast %41 : vector<16x64xf32> to vector<1x16x64xf32>
    %c0_39 = arith.constant 0 : index
    %c0_40 = arith.constant 0 : index
    %c0_41 = arith.constant 0 : index
    %43 = vector.load %arg7[%c0_39, %c0_40, %c0_41] : memref<1x16x64xf32, #tpu.memory_space<vmem>>, vector<1x16x64xf32>
    tpu.vector_store %arg7[%c0_39, %c0_40, %c0_41], %42 {strides = array<i32>} : memref<1x16x64xf32, #tpu.memory_space<vmem>>, vector<1x16x64xf32>,
    return
  }
  func.func @transform_0(%arg0: i32) -> (i32, i32, i32) {
    %c0_i32 = arith.constant 0 : i32
    %c0_i32_0 = arith.constant 0 : i32
    %c0_i32_1 = arith.constant 0 : i32
    return %arg0, %c0_i32, %c0_i32_0 : i32, i32, i32
  }
  func.func @transform_1(%arg0: i32) -> (i32, i32, i32) {
    %c0_i32 = arith.constant 0 : i32
    %c0_i32_0 = arith.constant 0 : i32
    %c0_i32_1 = arith.constant 0 : i32
    %c0_i32_2 = arith.constant 0 : i32
    return %c0_i32, %c0_i32_0, %c0_i32_1 : i32, i32, i32
  }
  func.func @transform_2(%arg0: i32) -> (i32, i32) {
    %c0_i32 = arith.constant 0 : i32
    %c0_i32_0 = arith.constant 0 : i32
    %c0_i32_1 = arith.constant 0 : i32
    return %c0_i32, %c0_i32_0 : i32, i32
  }
  func.func @transform_3(%arg0: i32) -> (i32, i32, i32) {
    %c0_i32 = arith.constant 0 : i32
    %c0_i32_0 = arith.constant 0 : i32
    %c0_i32_1 = arith.constant 0 : i32
    %c0_i32_2 = arith.constant 0 : i32
    return %c0_i32, %c0_i32_0, %c0_i32_1 : i32, i32, i32
  }
  func.func @transform_4(%arg0: i32) -> (i32, i32) {
    %c0_i32 = arith.constant 0 : i32
    %c0_i32_0 = arith.constant 0 : i32
    %c0_i32_1 = arith.constant 0 : i32
    return %c0_i32, %c0_i32_0 : i32, i32
  }
  func.func @transform_5(%arg0: i32) -> (i32, i32, i32) {
    %c0_i32 = arith.constant 0 : i32
    %c0_i32_0 = arith.constant 0 : i32
    %c0_i32_1 = arith.constant 0 : i32
    %c0_i32_2 = arith.constant 0 : i32
    return %c0_i32, %c0_i32_0, %c0_i32_1 : i32, i32, i32
  }
  func.func @transform_6(%arg0: i32) -> (i32, i32, i32) {
    %c0_i32 = arith.constant 0 : i32
    %c0_i32_0 = arith.constant 0 : i32
    %c0_i32_1 = arith.constant 0 : i32
    return %arg0, %c0_i32, %c0_i32_0 : i32, i32, i32
  }
}

</mosaic_0001>

<llo_original>
// kernel: tpu_custom_call.1
$region0: #{tpu_custom_call.1}
  #allocation0 [shape = 'u32[]', space=smem, size = 0x4, offset = 0x4, fixed_abs, tag = 'smem constant byte address 0x4 - core index']
  #allocation1 [shape = 'u32[144,128]{1,0:T(1,128)}', space=vmem, size = 0x12000, scoped, tag = 'internal scratch']
  %s0 = inlined_call_operand.vmem [shape: f32[2,16,64], index: 0, kind: input, shape index: {}]
  %s1 = inlined_call_operand.vmem [shape: f32[3,64,128], index: 1, kind: input, shape index: {}]
  %s2 = inlined_call_operand.vmem [shape: f32[1,128], index: 2, kind: input, shape index: {}]
  %s3 = inlined_call_operand.vmem [shape: f32[3,128,64], index: 3, kind: input, shape index: {}]
  %s4 = inlined_call_operand.vmem [shape: f32[1,64], index: 4, kind: input, shape index: {}]
  %s5 = inlined_call_operand.vmem [shape: f32[2,16,16], index: 5, kind: input, shape index: {}]
  %s6 = inlined_call_operand.hbm [shape: f32[2,16,64], index: 6, kind: output, shape index: {}]
  %s7 = sld [smem:[#allocation0]]
  $region57: #{tpu_custom_call.1} parent=0
    _
  %s9 = ssub.s32 1, %s7
  %s10 = scalar_select 0, %s9, %s7
  $region1: #{tpu_custom_call.1} parent=0
    #allocation2 [shape = 'u8[16384]{0}', space=vmem, size = 0x4000, scoped, tag = 'output window, operand 0']
    #allocation3 [shape = 's32[2]{0}', space=sflag, size = 0x8, scoped, tag = 'scoped memory for tpu_custom_call.1']
    %11 = vsyncpa [#allocation3], 0
    %s12 = scalar_lea.sflag [#allocation3], 1
    %13 = vsyncpa %s12, 0
    loop: start=0, step=1, limit=4
    $region2: #{tpu_custom_call.1} parent=1 // loop_pre_header
      _
    $region3: #{tpu_custom_call.1} parent=1 // loop_header
      %s15 = sphi 0, %s19
      %p16 = scmp.ge.s32.totalorder %s15, 4
      %s25 = sphi 0, %s27
      %s28 = sphi 0, %s25
      %s29 = sphi 0, %s28
      %s45 = sphi 0, %s29
      %s49 = sphi 0, %s49
      %s51 = sphi 0, %s49
      %s52 = sphi 0, %s51
      %s66 = sphi 0, %s52
      %s70 = sphi 0, %s70
      %s72 = sphi 0, %s70
      %s73 = sphi 0, %s72
      %s87 = sphi 0, %s73
      %s91 = sphi 0, %s91
      %s93 = sphi 0, %s91
      %s94 = sphi 0, %s93
      %s108 = sphi 0, %s94
      %s112 = sphi 0, %s112
      %s114 = sphi 0, %s112
      %s115 = sphi 0, %s114
      %s129 = sphi 0, %s115
      %s133 = sphi 0, %s133
      %s135 = sphi 0, %s133
      %s136 = sphi 0, %s135
      %s150 = sphi 0, %s136
      %s156 = sphi 0, %s158
      %s159 = sphi 0, %s156
      %s160 = sphi 0, %s159
      %s176 = sphi 0, %s160
    $region4: #{tpu_custom_call.1} parent=1 // loop_header_branch
      %18 = sbr.rel (%p16) target = $region8
    $region5: #{tpu_custom_call.1} parent=1 // loop_body
      %s20 = ssub.s32 %s15, 1
      %s21 = ssub.s32 %s15, 2
      %s22 = sadd.s32 %s15, 1
      %s23 = ssub.s32 %s15, %s22
      %p24 = scmp.eq.s32.totalorder %s23, 0
      %s26 = sadd.s32 %s25, 1
      %s27 = scalar_select %p24, %s25, %s26
      %p30 = pneg %p24
      %p31 = scmp.eq.s32.totalorder %s15, 1
      %p32 = por %p30, %p31
      %p33 = scmp.ne.s32.totalorder %s25, %s28
      %p34 = scmp.eq.s32.totalorder %s15, 0
      %p35 = por %p33, %p34
      %p36 = scmp.ne.s32.totalorder %s25, %s28
      %p37 = scmp.eq.s32.totalorder %s20, 1
      %p38 = por %p36, %p37
      %p39 = scmp.ne.s32.totalorder %s28, %s29
      %p40 = scmp.eq.s32.totalorder %s20, 0
      %p41 = por %p39, %p40
      %p42 = scmp.ne.s32.totalorder %s28, %s29
      %p43 = scmp.eq.s32.totalorder %s21, 1
      %p44 = por %p42, %p43
      %p46 = scmp.ne.s32.totalorder %s29, %s45
      %p47 = scmp.eq.s32.totalorder %s21, 0
      %p48 = por %p46, %p47
      %s50 = sadd.s32 %s49, 1
      %p53 = scmp.eq.s32.totalorder %s15, 1
      %p54 = scmp.ne.s32.totalorder %s49, %s51
      %p55 = scmp.eq.s32.totalorder %s15, 0
      %p56 = por %p54, %p55
      %p57 = scmp.ne.s32.totalorder %s49, %s51
      %p58 = scmp.eq.s32.totalorder %s20, 1
      %p59 = por %p57, %p58
      %p60 = scmp.ne.s32.totalorder %s51, %s52
      %p61 = scmp.eq.s32.totalorder %s20, 0
      %p62 = por %p60, %p61
      %p63 = scmp.ne.s32.totalorder %s51, %s52
      %p64 = scmp.eq.s32.totalorder %s21, 1
      %p65 = por %p63, %p64
      %p67 = scmp.ne.s32.totalorder %s52, %s66
      %p68 = scmp.eq.s32.totalorder %s21, 0
      %p69 = por %p67, %p68
      %s71 = sadd.s32 %s70, 1
      %p74 = scmp.eq.s32.totalorder %s15, 1
      %p75 = scmp.ne.s32.totalorder %s70, %s72
      %p76 = scmp.eq.s32.totalorder %s15, 0
      %p77 = por %p75, %p76
      %p78 = scmp.ne.s32.totalorder %s70, %s72
      %p79 = scmp.eq.s32.totalorder %s20, 1
      %p80 = por %p78, %p79
      %p81 = scmp.ne.s32.totalorder %s72, %s73
      %p82 = scmp.eq.s32.totalorder %s20, 0
      %p83 = por %p81, %p82
      %p84 = scmp.ne.s32.totalorder %s72, %s73
      %p85 = scmp.eq.s32.totalorder %s21, 1
      %p86 = por %p84, %p85
      %p88 = scmp.ne.s32.totalorder %s73, %s87
      %p89 = scmp.eq.s32.totalorder %s21, 0
      %p90 = por %p88, %p89
      %s92 = sadd.s32 %s91, 1
      %p95 = scmp.eq.s32.totalorder %s15, 1
      %p96 = scmp.ne.s32.totalorder %s91, %s93
      %p97 = scmp.eq.s32.totalorder %s15, 0
      %p98 = por %p96, %p97
      %p99 = scmp.ne.s32.totalorder %s91, %s93
      %p100 = scmp.eq.s32.totalorder %s20, 1
      %p101 = por %p99, %p100
      %p102 = scmp.ne.s32.totalorder %s93, %s94
      %p103 = scmp.eq.s32.totalorder %s20, 0
      %p104 = por %p102, %p103
      %p105 = scmp.ne.s32.totalorder %s93, %s94
      %p106 = scmp.eq.s32.totalorder %s21, 1
      %p107 = por %p105, %p106
      %p109 = scmp.ne.s32.totalorder %s94, %s108
      %p110 = scmp.eq.s32.totalorder %s21, 0
      %p111 = por %p109, %p110
      %s113 = sadd.s32 %s112, 1
      %p116 = scmp.eq.s32.totalorder %s15, 1
      %p117 = scmp.ne.s32.totalorder %s112, %s114
      %p118 = scmp.eq.s32.totalorder %s15, 0
      %p119 = por %p117, %p118
      %p120 = scmp.ne.s32.totalorder %s112, %s114
      %p121 = scmp.eq.s32.totalorder %s20, 1
      %p122 = por %p120, %p121
      %p123 = scmp.ne.s32.totalorder %s114, %s115
      %p124 = scmp.eq.s32.totalorder %s20, 0
      %p125 = por %p123, %p124
      %p126 = scmp.ne.s32.totalorder %s114, %s115
      %p127 = scmp.eq.s32.totalorder %s21, 1
      %p128 = por %p126, %p127
      %p130 = scmp.ne.s32.totalorder %s115, %s129
      %p131 = scmp.eq.s32.totalorder %s21, 0
      %p132 = por %p130, %p131
      %s134 = sadd.s32 %s133, 1
      %p137 = scmp.eq.s32.totalorder %s15, 1
      %p138 = scmp.ne.s32.totalorder %s133, %s135
      %p139 = scmp.eq.s32.totalorder %s15, 0
      %p140 = por %p138, %p139
      %p141 = scmp.ne.s32.totalorder %s133, %s135
      %p142 = scmp.eq.s32.totalorder %s20, 1
      %p143 = por %p141, %p142
      %p144 = scmp.ne.s32.totalorder %s135, %s136
      %p145 = scmp.eq.s32.totalorder %s20, 0
      %p146 = por %p144, %p145
      %p147 = scmp.ne.s32.totalorder %s135, %s136
      %p148 = scmp.eq.s32.totalorder %s21, 1
      %p149 = por %p147, %p148
      %p151 = scmp.ne.s32.totalorder %s136, %s150
      %p152 = scmp.eq.s32.totalorder %s21, 0
      %p153 = por %p151, %p152
      %s154 = ssub.s32 %s15, %s22
      %p155 = scmp.eq.s32.totalorder %s154, 0
      %s157 = sadd.s32 %s156, 1
      %s158 = scalar_select %p155, %s156, %s157
      %p161 = pneg %p155
      %p162 = scmp.eq.s32.totalorder %s15, 1
      %p163 = por %p161, %p162
      %p164 = scmp.ne.s32.totalorder %s156, %s159
      %p165 = scmp.eq.s32.totalorder %s15, 0
      %p166 = por %p164, %p165
      %p167 = scmp.ne.s32.totalorder %s156, %s159
      %p168 = scmp.eq.s32.totalorder %s20, 1
      %p169 = por %p167, %p168
      %p170 = scmp.ne.s32.totalorder %s159, %s160
      %p171 = scmp.eq.s32.totalorder %s20, 0
      %p172 = por %p170, %p171
      %p173 = scmp.ne.s32.totalorder %s159, %s160
      %p174 = scmp.eq.s32.totalorder %s21, 1
      %p175 = por %p173, %p174
      %p177 = scmp.ne.s32.totalorder %s160, %s176
      %p178 = scmp.eq.s32.totalorder %s21, 0
      %p179 = por %p177, %p178
      %p180 = scmp.le.s32.totalorder 1, %s15
      %p181 = scmp.lt.s32.totalorder %s15, 3
      %p182 = pnand %p180, %p181
      %p183 = pneg %p182
      // Predicated region
      $region9: #{tpu_custom_call.1} parent=5 // pred_check
        _
      $region10: #{tpu_custom_call.1} parent=5 // pred_check_branch
        %185 = sbr.rel (%p182) target = $region12
      $region11: #{tpu_custom_call.1} parent=5 // pred_region
        %s186 = ssub.s32 %s15, 1
        // Predicated region
        $region13: #{tpu_custom_call.1} parent=11 // pred_check
          %p187 = pneg %p62
        $region14: #{tpu_custom_call.1} parent=11 // pred_check_branch
          %189 = sbr.rel (%p187) target = $region16
        $region15: #{tpu_custom_call.1} parent=11 // pred_region
          _
        $region16: #{tpu_custom_call.1} parent=11 // pred_fallthru
          _
        // Predicated region
        $region17: #{tpu_custom_call.1} parent=11 // pred_check
          %p190 = pneg %p83
        $region18: #{tpu_custom_call.1} parent=11 // pred_check_branch
          %192 = sbr.rel (%p190) target = $region20
        $region19: #{tpu_custom_call.1} parent=11 // pred_region
          _
        $region20: #{tpu_custom_call.1} parent=11 // pred_fallthru
          _
        // Predicated region
        $region21: #{tpu_custom_call.1} parent=11 // pred_check
          %p193 = pneg %p104
        $region22: #{tpu_custom_call.1} parent=11 // pred_check_branch
          %195 = sbr.rel (%p193) target = $region24
        $region23: #{tpu_custom_call.1} parent=11 // pred_region
          _
        $region24: #{tpu_custom_call.1} parent=11 // pred_fallthru
          _
        // Predicated region
        $region25: #{tpu_custom_call.1} parent=11 // pred_check
          %p196 = pneg %p125
        $region26: #{tpu_custom_call.1} parent=11 // pred_check_branch
          %198 = sbr.rel (%p196) target = $region28
        $region27: #{tpu_custom_call.1} parent=11 // pred_region
          _
        $region28: #{tpu_custom_call.1} parent=11 // pred_fallthru
          _
        // Predicated region
        $region29: #{tpu_custom_call.1} parent=11 // pred_check
          %p199 = pneg %p146
        $region30: #{tpu_custom_call.1} parent=11 // pred_check_branch
          %201 = sbr.rel (%p199) target = $region32
        $region31: #{tpu_custom_call.1} parent=11 // pred_region
          _
        $region32: #{tpu_custom_call.1} parent=11 // pred_fallthru
          _
      $region12: #{tpu_custom_call.1} parent=5 // pred_fallthru
        _
      %p202 = scmp.lt.s32.totalorder %s15, 2
      // Predicated region
      $region33: #{tpu_custom_call.1} parent=5 // pred_check
        %p203 = pneg %p202
      $region34: #{tpu_custom_call.1} parent=5 // pred_check_branch
        %205 = sbr.rel (%p203) target = $region36
      $region35: #{tpu_custom_call.1} parent=5 // pred_region
        // Predicated region
        $region37: #{tpu_custom_call.1} parent=35 // pred_check
          %p206 = pneg %p35
        $region38: #{tpu_custom_call.1} parent=35 // pred_check_branch
          %208 = sbr.rel (%p206) target = $region40
        $region39: #{tpu_custom_call.1} parent=35 // pred_region
          %p209 = scmp.lt.s32.totalorder %s15, 1
          %s210 = scalar_select %p209, %s15, 1
          %s211 = smul.addr %s210, 2
          %s212 = smul.addr %s211, 8
          %s213 = scalar_lea.vmem %s0, %s212
        $region40: #{tpu_custom_call.1} parent=35 // pred_fallthru
          _
      $region36: #{tpu_custom_call.1} parent=5 // pred_fallthru
        _
      %p214 = scmp.le.s32.totalorder 1, %s15
      %p215 = scmp.lt.s32.totalorder %s15, 3
      %p216 = pnand %p214, %p215
      %p217 = pneg %p216
      // Predicated region
      $region41: #{tpu_custom_call.1} parent=5 // pred_check
        _
      $region42: #{tpu_custom_call.1} parent=5 // pred_check_branch
        %219 = sbr.rel (%p216) target = $region44
      $region43: #{tpu_custom_call.1} parent=5 // pred_region
        %s220 = ssub.s32 %s15, 1
        %p221 = scmp.lt.s32.totalorder %s20, 1
        %s222 = scalar_select %p221, %s20, 1
        %s223 = smul.addr %s222, 2
        %s224 = smul.addr %s223, 8
        %s225 = scalar_lea.vmem %s0, %s224
        %p226 = pneg %p41
        %p227 = pneg %p38
        %p228 = pneg %p62
        %p229 = pneg %p59
        %p230 = pneg %p83
        %p231 = pneg %p80
        %p232 = pneg %p104
        %p233 = pneg %p101
        %p234 = pneg %p125
        %p235 = pneg %p122
        %p236 = pneg %p146
        %p237 = pneg %p143
        %p238 = pneg %p172
        %p239 = pneg %p169
        %s240 = sand.u32 %s159, 1
        %s241 = scalar_lea.sflag [#allocation3], %s240
        %s242 = sand.u32 %s159, 1
        %s243 = smul.addr %s242, 16
        %s244 = scalar_lea.vmem [#allocation2], %s243
        %p245 = scmp.lt.s32.totalorder %s20, 1
        %s246 = scalar_select %p245, %s20, 1
        %s247 = smul.addr %s246, 2
        %s248 = smul.addr %s247, 8
        %s249 = scalar_lea.vmem %s0, %s248
        %v250 = vld [vmem:[%s5] sm:$0xff]
        %v251 = vld [vmem:[%s5 + $0x8] sm:$0xff]
        %s252 = scalar_lea.vmem %s5, 16
        %v253 = vld [vmem:[%s252] sm:$0xff]
        %v254 = vld [vmem:[%s252 + $0x8] sm:$0xff]
        %v255 = vld [vmem:[%s249] sm:$0xff]
        %v256 = vld [vmem:[%s249 + $0x8] sm:$0xff]
        %vm257 = vcmask 130048
        %v259 = vsel %vm257, %v250, 0
        %v262 = vsel %vm257, %v251, 0
        %264 = vmatprep.subr.mxu0 0.0
        %265 = vmatpush1.msra.mxu0 %v255
        %266 = vmatprep.subr.mxu0 0.0
        %267 = vmatpush1.msra.mxu0 %v256
        %268 = vmatprep.subr.mxu0 0.0
        %269 = vmatpush1.msra.mxu0 0.0
        %270 = vmatprep.subr.mxu0 0.0
        %271 = vmatpush1.msra.mxu0 0.0
        %272 = vmatprep.subr.mxu0 0.0
        %273 = vmatpush1.msra.mxu0 0.0
        %274 = vmatprep.subr.mxu0 0.0
        %275 = vmatpush1.msra.mxu0 0.0
        %276 = vmatprep.subr.mxu0 0.0
        %277 = vmatpush1.msra.mxu0 0.0
        %278 = vmatprep.subr.mxu0 0.0
        %279 = vmatpush1.msra.mxu0 0.0
        %280 = vmatprep.subr.mxu0 0.0
        %281 = vmatpush1.msra.mxu0 0.0
        %282 = vmatprep.subr.mxu0 0.0
        %283 = vmatpush1.msra.mxu0 0.0
        %284 = vmatprep.subr.mxu0 0.0
        %285 = vmatpush1.msra.mxu0 0.0
        %286 = vmatprep.subr.mxu0 0.0
        %287 = vmatpush1.msra.mxu0 0.0
        %288 = vmatprep.subr.mxu0 0.0
        %289 = vmatpush1.msra.mxu0 0.0
        %290 = vmatprep.subr.mxu0 0.0
        %291 = vmatpush1.msra.mxu0 0.0
        %292 = vmatprep.subr.mxu0 0.0
        %293 = vmatpush1.msra.mxu0 0.0
        %294 = vmatprep.subr.mxu0 0.0
        %295 = vmatpush1.msra.mxu0 0.0
        %296 = vmatprep.subr.mxu0 0.0
        %297 = vmatpush1.msra.mxu0 0.0
        %298 = vmatprep.subr.mxu0 0.0
        %299 = vmatpush1.msra.mxu0 0.0
        %300 = vmatprep.subr.mxu0 0.0
        %301 = vmatpush1.msra.mxu0 0.0
        %302 = vmatprep.subr.mxu0 0.0
        %303 = vmatpush1.msra.mxu0 0.0
        %304 = vmatprep.subr.mxu0 0.0
        %305 = vmatpush1.msra.mxu0 0.0
        %306 = vmatprep.subr.mxu0 0.0
        %307 = vmatpush1.msra.mxu0 0.0
        %308 = vmatprep.subr.mxu0 0.0
        %309 = vmatpush1.msra.mxu0 0.0
        %310 = vmatprep.subr.mxu0 0.0
        %311 = vmatpush1.msra.mxu0 0.0
        %312 = vmatprep.subr.mxu0 0.0
        %313 = vmatpush1.msra.mxu0 0.0
        %314 = vmatprep.subr.mxu0 0.0
        %315 = vmatpush1.msra.mxu0 0.0
        %316 = vmatprep.subr.mxu0 0.0
        %317 = vmatpush1.msra.mxu0 0.0
        %318 = vmatprep.subr.mxu0 0.0
        %319 = vmatpush1.msra.mxu0 0.0
        %320 = vmatprep.subr.mxu0 0.0
        %321 = vmatpush1.msra.mxu0 0.0
        %322 = vmatprep.subr.mxu0 0.0
        %323 = vmatpush1.msra.mxu0 0.0
        %324 = vmatprep.subr.mxu0 0.0
        %325 = vmatpush1.msra.mxu0 0.0
        %326 = vmatprep.subr.mxu0 0.0
        %327 = vmatpush1.msra.mxu0 0.0
        %328 = vmatprep.mubr.f32.mxu0 0.0
        %329 = vmatmul.mubr.f32.gmra.mrb[0].mxu0 %v259
        %v330 = vpop.f32.mrb[0].mxu0
        %v331 = vadd.f32 0.0, %v330
        %v332 = vpop.f32.mrb[0].mxu0
        %333 = vmatprep.mubr.f32.mxu0 0.0
        %334 = vmatmul.mubr.f32.gmra.mrb[0].mxu0 %v262
        %v335 = vpop.f32.mrb[0].mxu0
        %v336 = vadd.f32 0.0, %v335
        %v337 = vpop.f32.mrb[0].mxu0
        %338 = vdwg.mxu0
        %v340 = vsel %vm257, %v253, 0
        %v343 = vsel %vm257, %v254, 0
        %345 = vmatprep.subr.mxu0 0.0
        %346 = vmatpush1.msra.mxu0 %v255
        %347 = vmatprep.subr.mxu0 0.0
        %348 = vmatpush1.msra.mxu0 %v256
        %349 = vmatprep.subr.mxu0 0.0
        %350 = vmatpush1.msra.mxu0 0.0
        %351 = vmatprep.subr.mxu0 0.0
        %352 = vmatpush1.msra.mxu0 0.0
        %353 = vmatprep.subr.mxu0 0.0
        %354 = vmatpush1.msra.mxu0 0.0
        %355 = vmatprep.subr.mxu0 0.0
        %356 = vmatpush1.msra.mxu0 0.0
        %357 = vmatprep.subr.mxu0 0.0
        %358 = vmatpush1.msra.mxu0 0.0
        %359 = vmatprep.subr.mxu0 0.0
        %360 = vmatpush1.msra.mxu0 0.0
        %361 = vmatprep.subr.mxu0 0.0
        %362 = vmatpush1.msra.mxu0 0.0
        %363 = vmatprep.subr.mxu0 0.0
        %364 = vmatpush1.msra.mxu0 0.0
        %365 = vmatprep.subr.mxu0 0.0
        %366 = vmatpush1.msra.mxu0 0.0
        %367 = vmatprep.subr.mxu0 0.0
        %368 = vmatpush1.msra.mxu0 0.0
        %369 = vmatprep.subr.mxu0 0.0
        %370 = vmatpush1.msra.mxu0 0.0
        %371 = vmatprep.subr.mxu0 0.0
        %372 = vmatpush1.msra.mxu0 0.0
        %373 = vmatprep.subr.mxu0 0.0
        %374 = vmatpush1.msra.mxu0 0.0
        %375 = vmatprep.subr.mxu0 0.0
        %376 = vmatpush1.msra.mxu0 0.0
        %377 = vmatprep.subr.mxu0 0.0
        %378 = vmatpush1.msra.mxu0 0.0
        %379 = vmatprep.subr.mxu0 0.0
        %380 = vmatpush1.msra.mxu0 0.0
        %381 = vmatprep.subr.mxu0 0.0
        %382 = vmatpush1.msra.mxu0 0.0
        %383 = vmatprep.subr.mxu0 0.0
        %384 = vmatpush1.msra.mxu0 0.0
        %385 = vmatprep.subr.mxu0 0.0
        %386 = vmatpush1.msra.mxu0 0.0
        %387 = vmatprep.subr.mxu0 0.0
        %388 = vmatpush1.msra.mxu0 0.0
        %389 = vmatprep.subr.mxu0 0.0
        %390 = vmatpush1.msra.mxu0 0.0
        %391 = vmatprep.subr.mxu0 0.0
        %392 = vmatpush1.msra.mxu0 0.0
        %393 = vmatprep.subr.mxu0 0.0
        %394 = vmatpush1.msra.mxu0 0.0
        %395 = vmatprep.subr.mxu0 0.0
        %396 = vmatpush1.msra.mxu0 0.0
        %397 = vmatprep.subr.mxu0 0.0
        %398 = vmatpush1.msra.mxu0 0.0
        %399 = vmatprep.subr.mxu0 0.0
        %400 = vmatpush1.msra.mxu0 0.0
        %401 = vmatprep.subr.mxu0 0.0
        %402 = vmatpush1.msra.mxu0 0.0
        %403 = vmatprep.subr.mxu0 0.0
        %404 = vmatpush1.msra.mxu0 0.0
        %405 = vmatprep.subr.mxu0 0.0
        %406 = vmatpush1.msra.mxu0 0.0
        %407 = vmatprep.subr.mxu0 0.0
        %408 = vmatpush1.msra.mxu0 0.0
        %409 = vmatprep.mubr.f32.mxu0 0.0
        %410 = vmatmul.mubr.f32.gmra.mrb[0].mxu0 %v340
        %v411 = vpop.f32.mrb[0].mxu0
        %v412 = vadd.f32 0.0, %v411
        %v413 = vpop.f32.mrb[0].mxu0
        %414 = vmatprep.mubr.f32.mxu0 0.0
        %415 = vmatmul.mubr.f32.gmra.mrb[0].mxu0 %v343
        %v416 = vpop.f32.mrb[0].mxu0
        %v417 = vadd.f32 0.0, %v416
        %v418 = vpop.f32.mrb[0].mxu0
        %419 = vdwg.mxu0
        %s420 = scalar_lea.vmem %s1, 64
        %v421 = vld [vmem:[%s420] sm:$0xff]
        %v422 = vld [vmem:[%s420 + $0x8] sm:$0xff]
        %v423 = vld [vmem:[%s420 + $0x10] sm:$0xff]
        %v424 = vld [vmem:[%s420 + $0x18] sm:$0xff]
        %v425 = vld [vmem:[%s420 + $0x20] sm:$0xff]
        %v426 = vld [vmem:[%s420 + $0x28] sm:$0xff]
        %v427 = vld [vmem:[%s420 + $0x30] sm:$0xff]
        %v428 = vld [vmem:[%s420 + $0x38] sm:$0xff]
        %v429 = vld [vmem:[%s1] sm:$0xff]
        %v430 = vld [vmem:[%s1 + $0x8] sm:$0xff]
        %v431 = vld [vmem:[%s1 + $0x10] sm:$0xff]
        %v432 = vld [vmem:[%s1 + $0x18] sm:$0xff]
        %v433 = vld [vmem:[%s1 + $0x20] sm:$0xff]
        %v434 = vld [vmem:[%s1 + $0x28] sm:$0xff]
        %v435 = vld [vmem:[%s1 + $0x30] sm:$0xff]
        %v436 = vld [vmem:[%s1 + $0x38] sm:$0xff]
        %vm437 = vcmask 523264
        %v439 = vsel %vm437, %v331, 0
        %v442 = vsel %vm437, %v336, 0
        %444 = vmatprep.subr.mxu0 0.0
        %445 = vmatpush1.msra.mxu0 %v429
        %446 = vmatprep.subr.mxu0 0.0
        %447 = vmatpush1.msra.mxu0 %v430
        %448 = vmatprep.subr.mxu0 0.0
        %449 = vmatpush1.msra.mxu0 %v431
        %450 = vmatprep.subr.mxu0 0.0
        %451 = vmatpush1.msra.mxu0 %v432
        %452 = vmatprep.subr.mxu0 0.0
        %453 = vmatpush1.msra.mxu0 %v433
        %454 = vmatprep.subr.mxu0 0.0
        %455 = vmatpush1.msra.mxu0 %v434
        %456 = vmatprep.subr.mxu0 0.0
        %457 = vmatpush1.msra.mxu0 %v435
        %458 = vmatprep.subr.mxu0 0.0
        %459 = vmatpush1.msra.mxu0 %v436
        %460 = vmatprep.subr.mxu0 0.0
        %461 = vmatpush1.msra.mxu0 0.0
        %462 = vmatprep.subr.mxu0 0.0
        %463 = vmatpush1.msra.mxu0 0.0
        %464 = vmatprep.subr.mxu0 0.0
        %465 = vmatpush1.msra.mxu0 0.0
        %466 = vmatprep.subr.mxu0 0.0
        %467 = vmatpush1.msra.mxu0 0.0
        %468 = vmatprep.subr.mxu0 0.0
        %469 = vmatpush1.msra.mxu0 0.0
        %470 = vmatprep.subr.mxu0 0.0
        %471 = vmatpush1.msra.mxu0 0.0
        %472 = vmatprep.subr.mxu0 0.0
        %473 = vmatpush1.msra.mxu0 0.0
        %474 = vmatprep.subr.mxu0 0.0
        %475 = vmatpush1.msra.mxu0 0.0
        %476 = vmatprep.subr.mxu0 0.0
        %477 = vmatpush1.msra.mxu0 0.0
        %478 = vmatprep.subr.mxu0 0.0
        %479 = vmatpush1.msra.mxu0 0.0
        %480 = vmatprep.subr.mxu0 0.0
        %481 = vmatpush1.msra.mxu0 0.0
        %482 = vmatprep.subr.mxu0 0.0
        %483 = vmatpush1.msra.mxu0 0.0
        %484 = vmatprep.subr.mxu0 0.0
        %485 = vmatpush1.msra.mxu0 0.0
        %486 = vmatprep.subr.mxu0 0.0
        %487 = vmatpush1.msra.mxu0 0.0
        %488 = vmatprep.subr.mxu0 0.0
        %489 = vmatpush1.msra.mxu0 0.0
        %490 = vmatprep.subr.mxu0 0.0
        %491 = vmatpush1.msra.mxu0 0.0
        %492 = vmatprep.subr.mxu0 0.0
        %493 = vmatpush1.msra.mxu0 0.0
        %494 = vmatprep.subr.mxu0 0.0
        %495 = vmatpush1.msra.mxu0 0.0
        %496 = vmatprep.subr.mxu0 0.0
        %497 = vmatpush1.msra.mxu0 0.0
        %498 = vmatprep.subr.mxu0 0.0
        %499 = vmatpush1.msra.mxu0 0.0
        %500 = vmatprep.subr.mxu0 0.0
        %501 = vmatpush1.msra.mxu0 0.0
        %502 = vmatprep.subr.mxu0 0.0
        %503 = vmatpush1.msra.mxu0 0.0
        %504 = vmatprep.subr.mxu0 0.0
        %505 = vmatpush1.msra.mxu0 0.0
        %506 = vmatprep.subr.mxu0 0.0
        %507 = vmatpush1.msra.mxu0 0.0
        %508 = vmatprep.mubr.f32.mxu0 0.0
        %509 = vmatmul.mubr.f32.gmra.mrb[0].mxu0 %v439
        %v510 = vpop.f32.mrb[0].mxu0
        %v511 = vadd.f32 0.0, %v510
        %v512 = vpop.f32.mrb[0].mxu0
        %513 = vmatprep.mubr.f32.mxu0 0.0
        %514 = vmatmul.mubr.f32.gmra.mrb[0].mxu0 %v442
        %v515 = vpop.f32.mrb[0].mxu0
        %v516 = vadd.f32 0.0, %v515
        %v517 = vpop.f32.mrb[0].mxu0
        %518 = vdwg.mxu0
        %v520 = vsel %vm437, %v255, 0
        %v523 = vsel %vm437, %v256, 0
        %525 = vmatprep.subr.mxu0 0.0
        %526 = vmatpush1.msra.mxu0 %v421
        %527 = vmatprep.subr.mxu0 0.0
        %528 = vmatpush1.msra.mxu0 %v422
        %529 = vmatprep.subr.mxu0 0.0
        %530 = vmatpush1.msra.mxu0 %v423
        %531 = vmatprep.subr.mxu0 0.0
        %532 = vmatpush1.msra.mxu0 %v424
        %533 = vmatprep.subr.mxu0 0.0
        %534 = vmatpush1.msra.mxu0 %v425
        %535 = vmatprep.subr.mxu0 0.0
        %536 = vmatpush1.msra.mxu0 %v426
        %537 = vmatprep.subr.mxu0 0.0
        %538 = vmatpush1.msra.mxu0 %v427
        %539 = vmatprep.subr.mxu0 0.0
        %540 = vmatpush1.msra.mxu0 %v428
        %541 = vmatprep.subr.mxu0 0.0
        %542 = vmatpush1.msra.mxu0 0.0
        %543 = vmatprep.subr.mxu0 0.0
        %544 = vmatpush1.msra.mxu0 0.0
        %545 = vmatprep.subr.mxu0 0.0
        %546 = vmatpush1.msra.mxu0 0.0
        %547 = vmatprep.subr.mxu0 0.0
        %548 = vmatpush1.msra.mxu0 0.0
        %549 = vmatprep.subr.mxu0 0.0
        %550 = vmatpush1.msra.mxu0 0.0
        %551 = vmatprep.subr.mxu0 0.0
        %552 = vmatpush1.msra.mxu0 0.0
        %553 = vmatprep.subr.mxu0 0.0
        %554 = vmatpush1.msra.mxu0 0.0
        %555 = vmatprep.subr.mxu0 0.0
        %556 = vmatpush1.msra.mxu0 0.0
        %557 = vmatprep.subr.mxu0 0.0
        %558 = vmatpush1.msra.mxu0 0.0
        %559 = vmatprep.subr.mxu0 0.0
        %560 = vmatpush1.msra.mxu0 0.0
        %561 = vmatprep.subr.mxu0 0.0
        %562 = vmatpush1.msra.mxu0 0.0
        %563 = vmatprep.subr.mxu0 0.0
        %564 = vmatpush1.msra.mxu0 0.0
        %565 = vmatprep.subr.mxu0 0.0
        %566 = vmatpush1.msra.mxu0 0.0
        %567 = vmatprep.subr.mxu0 0.0
        %568 = vmatpush1.msra.mxu0 0.0
        %569 = vmatprep.subr.mxu0 0.0
        %570 = vmatpush1.msra.mxu0 0.0
        %571 = vmatprep.subr.mxu0 0.0
        %572 = vmatpush1.msra.mxu0 0.0
        %573 = vmatprep.subr.mxu0 0.0
        %574 = vmatpush1.msra.mxu0 0.0
        %575 = vmatprep.subr.mxu0 0.0
        %576 = vmatpush1.msra.mxu0 0.0
        %577 = vmatprep.subr.mxu0 0.0
        %578 = vmatpush1.msra.mxu0 0.0
        %579 = vmatprep.subr.mxu0 0.0
        %580 = vmatpush1.msra.mxu0 0.0
        %581 = vmatprep.subr.mxu0 0.0
        %582 = vmatpush1.msra.mxu0 0.0
        %583 = vmatprep.subr.mxu0 0.0
        %584 = vmatpush1.msra.mxu0 0.0
        %585 = vmatprep.subr.mxu0 0.0
        %586 = vmatpush1.msra.mxu0 0.0
        %587 = vmatprep.subr.mxu0 0.0
        %588 = vmatpush1.msra.mxu0 0.0
        %589 = vmatprep.mubr.f32.mxu0 0.0
        %590 = vmatmul.mubr.f32.gmra.mrb[0].mxu0 %v520
        %v591 = vpop.f32.mrb[0].mxu0
        %v592 = vadd.f32 %v511, %v591
        %v593 = vpop.f32.mrb[0].mxu0
        %594 = vmatprep.mubr.f32.mxu0 0.0
        %595 = vmatmul.mubr.f32.gmra.mrb[0].mxu0 %v523
        %v596 = vpop.f32.mrb[0].mxu0
        %v597 = vadd.f32 %v516, %v596
        %v598 = vpop.f32.mrb[0].mxu0
        %599 = vdwg.mxu0
        %s600 = scalar_lea.vmem %s1, 128
        %v601 = vld [vmem:[%s600] sm:$0xff]
        %v602 = vld [vmem:[%s600 + $0x8] sm:$0xff]
        %v603 = vld [vmem:[%s600 + $0x10] sm:$0xff]
        %v604 = vld [vmem:[%s600 + $0x18] sm:$0xff]
        %v605 = vld [vmem:[%s600 + $0x20] sm:$0xff]
        %v606 = vld [vmem:[%s600 + $0x28] sm:$0xff]
        %v607 = vld [vmem:[%s600 + $0x30] sm:$0xff]
        %v608 = vld [vmem:[%s600 + $0x38] sm:$0xff]
        %v610 = vsel %vm437, %v412, 0
        %v613 = vsel %vm437, %v417, 0
        %615 = vmatprep.subr.mxu0 0.0
        %616 = vmatpush1.msra.mxu0 %v601
        %617 = vmatprep.subr.mxu0 0.0
        %618 = vmatpush1.msra.mxu0 %v602
        %619 = vmatprep.subr.mxu0 0.0
        %620 = vmatpush1.msra.mxu0 %v603
        %621 = vmatprep.subr.mxu0 0.0
        %622 = vmatpush1.msra.mxu0 %v604
        %623 = vmatprep.subr.mxu0 0.0
        %624 = vmatpush1.msra.mxu0 %v605
        %625 = vmatprep.subr.mxu0 0.0
        %626 = vmatpush1.msra.mxu0 %v606
        %627 = vmatprep.subr.mxu0 0.0
        %628 = vmatpush1.msra.mxu0 %v607
        %629 = vmatprep.subr.mxu0 0.0
        %630 = vmatpush1.msra.mxu0 %v608
        %631 = vmatprep.subr.mxu0 0.0
        %632 = vmatpush1.msra.mxu0 0.0
        %633 = vmatprep.subr.mxu0 0.0
        %634 = vmatpush1.msra.mxu0 0.0
        %635 = vmatprep.subr.mxu0 0.0
        %636 = vmatpush1.msra.mxu0 0.0
        %637 = vmatprep.subr.mxu0 0.0
        %638 = vmatpush1.msra.mxu0 0.0
        %639 = vmatprep.subr.mxu0 0.0
        %640 = vmatpush1.msra.mxu0 0.0
        %641 = vmatprep.subr.mxu0 0.0
        %642 = vmatpush1.msra.mxu0 0.0
        %643 = vmatprep.subr.mxu0 0.0
        %644 = vmatpush1.msra.mxu0 0.0
        %645 = vmatprep.subr.mxu0 0.0
        %646 = vmatpush1.msra.mxu0 0.0
        %647 = vmatprep.subr.mxu0 0.0
        %648 = vmatpush1.msra.mxu0 0.0
        %649 = vmatprep.subr.mxu0 0.0
        %650 = vmatpush1.msra.mxu0 0.0
        %651 = vmatprep.subr.mxu0 0.0
        %652 = vmatpush1.msra.mxu0 0.0
        %653 = vmatprep.subr.mxu0 0.0
        %654 = vmatpush1.msra.mxu0 0.0
        %655 = vmatprep.subr.mxu0 0.0
        %656 = vmatpush1.msra.mxu0 0.0
        %657 = vmatprep.subr.mxu0 0.0
        %658 = vmatpush1.msra.mxu0 0.0
        %659 = vmatprep.subr.mxu0 0.0
        %660 = vmatpush1.msra.mxu0 0.0
        %661 = vmatprep.subr.mxu0 0.0
        %662 = vmatpush1.msra.mxu0 0.0
        %663 = vmatprep.subr.mxu0 0.0
        %664 = vmatpush1.msra.mxu0 0.0
        %665 = vmatprep.subr.mxu0 0.0
        %666 = vmatpush1.msra.mxu0 0.0
        %667 = vmatprep.subr.mxu0 0.0
        %668 = vmatpush1.msra.mxu0 0.0
        %669 = vmatprep.subr.mxu0 0.0
        %670 = vmatpush1.msra.mxu0 0.0
        %671 = vmatprep.subr.mxu0 0.0
        %672 = vmatpush1.msra.mxu0 0.0
        %673 = vmatprep.subr.mxu0 0.0
        %674 = vmatpush1.msra.mxu0 0.0
        %675 = vmatprep.subr.mxu0 0.0
        %676 = vmatpush1.msra.mxu0 0.0
        %677 = vmatprep.subr.mxu0 0.0
        %678 = vmatpush1.msra.mxu0 0.0
        %679 = vmatprep.mubr.f32.mxu0 0.0
        %680 = vmatmul.mubr.f32.gmra.mrb[0].mxu0 %v610
        %v681 = vpop.f32.mrb[0].mxu0
        %v682 = vadd.f32 0.0, %v681
        %v683 = vpop.f32.mrb[0].mxu0
        %684 = vmatprep.mubr.f32.mxu0 0.0
        %685 = vmatmul.mubr.f32.gmra.mrb[0].mxu0 %v613
        %v686 = vpop.f32.mrb[0].mxu0
        %v687 = vadd.f32 0.0, %v686
        %v688 = vpop.f32.mrb[0].mxu0
        %689 = vdwg.mxu0
        %v690 = vadd.f32 %v592, %v682
        %v691 = vadd.f32 %v597, %v687
        %v692 = vld [vmem:[%s2] sm:$0x1]
        %v694 = vlaneseq
        %v695 = vshrl.u32 %v694, 7
        %v696 = vsub.s32 0, %v695
        %v697 = vrot.slane %v692, %v696
        %v699 = vadd.f32 %v690, %v697
        %v700 = vadd.f32 %v691, %v697
        %v701 = vmax.f32 %v699, 0.0
        %v702 = vmax.f32 %v700, 0.0
        %v703 = vld [vmem:[%s3] sm:$0xff]
        %v704 = vld [vmem:[%s3 + $0x8] sm:$0xff]
        %v705 = vld [vmem:[%s3 + $0x10] sm:$0xff]
        %v706 = vld [vmem:[%s3 + $0x18] sm:$0xff]
        %v707 = vld [vmem:[%s3 + $0x20] sm:$0xff]
        %v708 = vld [vmem:[%s3 + $0x28] sm:$0xff]
        %v709 = vld [vmem:[%s3 + $0x30] sm:$0xff]
        %v710 = vld [vmem:[%s3 + $0x38] sm:$0xff]
        %v711 = vld [vmem:[%s3 + $0x40] sm:$0xff]
        %v712 = vld [vmem:[%s3 + $0x48] sm:$0xff]
        %v713 = vld [vmem:[%s3 + $0x50] sm:$0xff]
        %v714 = vld [vmem:[%s3 + $0x58] sm:$0xff]
        %v715 = vld [vmem:[%s3 + $0x60] sm:$0xff]
        %v716 = vld [vmem:[%s3 + $0x68] sm:$0xff]
        %v717 = vld [vmem:[%s3 + $0x70] sm:$0xff]
        %v718 = vld [vmem:[%s3 + $0x78] sm:$0xff]
        %719 = vmatprep.subr.mxu0 0.0
        %720 = vmatpush1.msra.mxu0 %v703
        %721 = vmatprep.subr.mxu0 0.0
        %722 = vmatpush1.msra.mxu0 %v704
        %723 = vmatprep.subr.mxu0 0.0
        %724 = vmatpush1.msra.mxu0 %v705
        %725 = vmatprep.subr.mxu0 0.0
        %726 = vmatpush1.msra.mxu0 %v706
        %727 = vmatprep.subr.mxu0 0.0
        %728 = vmatpush1.msra.mxu0 %v707
        %729 = vmatprep.subr.mxu0 0.0
        %730 = vmatpush1.msra.mxu0 %v708
        %731 = vmatprep.subr.mxu0 0.0
        %732 = vmatpush1.msra.mxu0 %v709
        %733 = vmatprep.subr.mxu0 0.0
        %734 = vmatpush1.msra.mxu0 %v710
        %735 = vmatprep.subr.mxu0 0.0
        %736 = vmatpush1.msra.mxu0 %v711
        %737 = vmatprep.subr.mxu0 0.0
        %738 = vmatpush1.msra.mxu0 %v712
        %739 = vmatprep.subr.mxu0 0.0
        %740 = vmatpush1.msra.mxu0 %v713
        %741 = vmatprep.subr.mxu0 0.0
        %742 = vmatpush1.msra.mxu0 %v714
        %743 = vmatprep.subr.mxu0 0.0
        %744 = vmatpush1.msra.mxu0 %v715
        %745 = vmatprep.subr.mxu0 0.0
        %746 = vmatpush1.msra.mxu0 %v716
        %747 = vmatprep.subr.mxu0 0.0
        %748 = vmatpush1.msra.mxu0 %v717
        %749 = vmatprep.subr.mxu0 0.0
        %750 = vmatpush1.msra.mxu0 %v718
        %751 = vmatprep.subr.mxu0 0.0
        %752 = vmatpush1.msra.mxu0 0.0
        %753 = vmatprep.subr.mxu0 0.0
        %754 = vmatpush1.msra.mxu0 0.0
        %755 = vmatprep.subr.mxu0 0.0
        %756 = vmatpush1.msra.mxu0 0.0
        %757 = vmatprep.subr.mxu0 0.0
        %758 = vmatpush1.msra.mxu0 0.0
        %759 = vmatprep.subr.mxu0 0.0
        %760 = vmatpush1.msra.mxu0 0.0
        %761 = vmatprep.subr.mxu0 0.0
        %762 = vmatpush1.msra.mxu0 0.0
        %763 = vmatprep.subr.mxu0 0.0
        %764 = vmatpush1.msra.mxu0 0.0
        %765 = vmatprep.subr.mxu0 0.0
        %766 = vmatpush1.msra.mxu0 0.0
        %767 = vmatprep.subr.mxu0 0.0
        %768 = vmatpush1.msra.mxu0 0.0
        %769 = vmatprep.subr.mxu0 0.0
        %770 = vmatpush1.msra.mxu0 0.0
        %771 = vmatprep.subr.mxu0 0.0
        %772 = vmatpush1.msra.mxu0 0.0
        %773 = vmatprep.subr.mxu0 0.0
        %774 = vmatpush1.msra.mxu0 0.0
        %775 = vmatprep.subr.mxu0 0.0
        %776 = vmatpush1.msra.mxu0 0.0
        %777 = vmatprep.subr.mxu0 0.0
        %778 = vmatpush1.msra.mxu0 0.0
        %779 = vmatprep.subr.mxu0 0.0
        %780 = vmatpush1.msra.mxu0 0.0
        %781 = vmatprep.subr.mxu0 0.0
        %782 = vmatpush1.msra.mxu0 0.0
        %783 = vmatprep.mubr.f32.mxu0 0.0
        %784 = vmatmul.mubr.f32.gmra.mrb[0].mxu0 %v701
        %v785 = vpop.f32.mrb[0].mxu0
        %v786 = vadd.f32 0.0, %v785
        %v787 = vpop.f32.mrb[0].mxu0
        %788 = vmatprep.mubr.f32.mxu0 0.0
        %789 = vmatmul.mubr.f32.gmra.mrb[0].mxu0 %v702
        %v790 = vpop.f32.mrb[0].mxu0
        %v791 = vadd.f32 0.0, %v790
        %v792 = vpop.f32.mrb[0].mxu0
        %793 = vdwg.mxu0
        %s794 = scalar_lea.vmem %s3, 128
        %v795 = vld [vmem:[%s794] sm:$0xff]
        %v796 = vld [vmem:[%s794 + $0x8] sm:$0xff]
        %v797 = vld [vmem:[%s794 + $0x10] sm:$0xff]
        %v798 = vld [vmem:[%s794 + $0x18] sm:$0xff]
        %v799 = vld [vmem:[%s794 + $0x20] sm:$0xff]
        %v800 = vld [vmem:[%s794 + $0x28] sm:$0xff]
        %v801 = vld [vmem:[%s794 + $0x30] sm:$0xff]
        %v802 = vld [vmem:[%s794 + $0x38] sm:$0xff]
        %v803 = vld [vmem:[%s794 + $0x40] sm:$0xff]
        %v804 = vld [vmem:[%s794 + $0x48] sm:$0xff]
        %v805 = vld [vmem:[%s794 + $0x50] sm:$0xff]
        %v806 = vld [vmem:[%s794 + $0x58] sm:$0xff]
        %v807 = vld [vmem:[%s794 + $0x60] sm:$0xff]
        %v808 = vld [vmem:[%s794 + $0x68] sm:$0xff]
        %v809 = vld [vmem:[%s794 + $0x70] sm:$0xff]
        %v810 = vld [vmem:[%s794 + $0x78] sm:$0xff]
        %s811 = scalar_lea.vmem %s3, 256
        %v812 = vld [vmem:[%s811] sm:$0xff]
        %v813 = vld [vmem:[%s811 + $0x8] sm:$0xff]
        %v814 = vld [vmem:[%s811 + $0x10] sm:$0xff]
        %v815 = vld [vmem:[%s811 + $0x18] sm:$0xff]
        %v816 = vld [vmem:[%s811 + $0x20] sm:$0xff]
        %v817 = vld [vmem:[%s811 + $0x28] sm:$0xff]
        %v818 = vld [vmem:[%s811 + $0x30] sm:$0xff]
        %v819 = vld [vmem:[%s811 + $0x38] sm:$0xff]
        %v820 = vld [vmem:[%s811 + $0x40] sm:$0xff]
        %v821 = vld [vmem:[%s811 + $0x48] sm:$0xff]
        %v822 = vld [vmem:[%s811 + $0x50] sm:$0xff]
        %v823 = vld [vmem:[%s811 + $0x58] sm:$0xff]
        %v824 = vld [vmem:[%s811 + $0x60] sm:$0xff]
        %v825 = vld [vmem:[%s811 + $0x68] sm:$0xff]
        %v826 = vld [vmem:[%s811 + $0x70] sm:$0xff]
        %v827 = vld [vmem:[%s811 + $0x78] sm:$0xff]
        %828 = vmatprep.subr.mxu0 0.0
        %829 = vmatpush1.msra.mxu0 %v812
        %830 = vmatprep.subr.mxu0 0.0
        %831 = vmatpush1.msra.mxu0 %v813
        %832 = vmatprep.subr.mxu0 0.0
        %833 = vmatpush1.msra.mxu0 %v814
        %834 = vmatprep.subr.mxu0 0.0
        %835 = vmatpush1.msra.mxu0 %v815
        %836 = vmatprep.subr.mxu0 0.0
        %837 = vmatpush1.msra.mxu0 %v816
        %838 = vmatprep.subr.mxu0 0.0
        %839 = vmatpush1.msra.mxu0 %v817
        %840 = vmatprep.subr.mxu0 0.0
        %841 = vmatpush1.msra.mxu0 %v818
        %842 = vmatprep.subr.mxu0 0.0
        %843 = vmatpush1.msra.mxu0 %v819
        %844 = vmatprep.subr.mxu0 0.0
        %845 = vmatpush1.msra.mxu0 %v820
        %846 = vmatprep.subr.mxu0 0.0
        %847 = vmatpush1.msra.mxu0 %v821
        %848 = vmatprep.subr.mxu0 0.0
        %849 = vmatpush1.msra.mxu0 %v822
        %850 = vmatprep.subr.mxu0 0.0
        %851 = vmatpush1.msra.mxu0 %v823
        %852 = vmatprep.subr.mxu0 0.0
        %853 = vmatpush1.msra.mxu0 %v824
        %854 = vmatprep.subr.mxu0 0.0
        %855 = vmatpush1.msra.mxu0 %v825
        %856 = vmatprep.subr.mxu0 0.0
        %857 = vmatpush1.msra.mxu0 %v826
        %858 = vmatprep.subr.mxu0 0.0
        %859 = vmatpush1.msra.mxu0 %v827
        %860 = vmatprep.subr.mxu0 0.0
        %861 = vmatpush1.msra.mxu0 0.0
        %862 = vmatprep.subr.mxu0 0.0
        %863 = vmatpush1.msra.mxu0 0.0
        %864 = vmatprep.subr.mxu0 0.0
        %865 = vmatpush1.msra.mxu0 0.0
        %866 = vmatprep.subr.mxu0 0.0
        %867 = vmatpush1.msra.mxu0 0.0
        %868 = vmatprep.subr.mxu0 0.0
        %869 = vmatpush1.msra.mxu0 0.0
        %870 = vmatprep.subr.mxu0 0.0
        %871 = vmatpush1.msra.mxu0 0.0
        %872 = vmatprep.subr.mxu0 0.0
        %873 = vmatpush1.msra.mxu0 0.0
        %874 = vmatprep.subr.mxu0 0.0
        %875 = vmatpush1.msra.mxu0 0.0
        %876 = vmatprep.subr.mxu0 0.0
        %877 = vmatpush1.msra.mxu0 0.0
        %878 = vmatprep.subr.mxu0 0.0
        %879 = vmatpush1.msra.mxu0 0.0
        %880 = vmatprep.subr.mxu0 0.0
        %881 = vmatpush1.msra.mxu0 0.0
        %882 = vmatprep.subr.mxu0 0.0
        %883 = vmatpush1.msra.mxu0 0.0
        %884 = vmatprep.subr.mxu0 0.0
        %885 = vmatpush1.msra.mxu0 0.0
        %886 = vmatprep.subr.mxu0 0.0
        %887 = vmatpush1.msra.mxu0 0.0
        %888 = vmatprep.subr.mxu0 0.0
        %889 = vmatpush1.msra.mxu0 0.0
        %890 = vmatprep.subr.mxu0 0.0
        %891 = vmatpush1.msra.mxu0 0.0
        %892 = vmatprep.mubr.f32.mxu0 0.0
        %893 = vmatmul.mubr.f32.gmra.mrb[0].mxu0 %v701
        %v894 = vpop.f32.mrb[0].mxu0
        %v895 = vadd.f32 0.0, %v894
        %v896 = vpop.f32.mrb[0].mxu0
        %897 = vmatprep.mubr.f32.mxu0 0.0
        %898 = vmatmul.mubr.f32.gmra.mrb[0].mxu0 %v702
        %v899 = vpop.f32.mrb[0].mxu0
        %v900 = vadd.f32 0.0, %v899
        %v901 = vpop.f32.mrb[0].mxu0
        %902 = vdwg.mxu0
        %903 = vmatprep.subr.mxu0 0.0
        %904 = vmatpush1.msra.mxu0 %v786
        %905 = vmatprep.subr.mxu0 0.0
        %906 = vmatpush1.msra.mxu0 %v791
        %907 = vmatprep.subr.mxu0 0.0
        %908 = vmatpush1.msra.mxu0 0.0
        %909 = vmatprep.subr.mxu0 0.0
        %910 = vmatpush1.msra.mxu0 0.0
        %911 = vmatprep.subr.mxu0 0.0
        %912 = vmatpush1.msra.mxu0 0.0
        %913 = vmatprep.subr.mxu0 0.0
        %914 = vmatpush1.msra.mxu0 0.0
        %915 = vmatprep.subr.mxu0 0.0
        %916 = vmatpush1.msra.mxu0 0.0
        %917 = vmatprep.subr.mxu0 0.0
        %918 = vmatpush1.msra.mxu0 0.0
        %919 = vmatprep.subr.mxu0 0.0
        %920 = vmatpush1.msra.mxu0 0.0
        %921 = vmatprep.subr.mxu0 0.0
        %922 = vmatpush1.msra.mxu0 0.0
        %923 = vmatprep.subr.mxu0 0.0
        %924 = vmatpush1.msra.mxu0 0.0
        %925 = vmatprep.subr.mxu0 0.0
        %926 = vmatpush1.msra.mxu0 0.0
        %927 = vmatprep.subr.mxu0 0.0
        %928 = vmatpush1.msra.mxu0 0.0
        %929 = vmatprep.subr.mxu0 0.0
        %930 = vmatpush1.msra.mxu0 0.0
        %931 = vmatprep.subr.mxu0 0.0
        %932 = vmatpush1.msra.mxu0 0.0
        %933 = vmatprep.subr.mxu0 0.0
        %934 = vmatpush1.msra.mxu0 0.0
        %935 = vmatprep.subr.mxu0 0.0
        %936 = vmatpush1.msra.mxu0 0.0
        %937 = vmatprep.subr.mxu0 0.0
        %938 = vmatpush1.msra.mxu0 0.0
        %939 = vmatprep.subr.mxu0 0.0
        %940 = vmatpush1.msra.mxu0 0.0
        %941 = vmatprep.subr.mxu0 0.0
        %942 = vmatpush1.msra.mxu0 0.0
        %943 = vmatprep.subr.mxu0 0.0
        %944 = vmatpush1.msra.mxu0 0.0
        %945 = vmatprep.subr.mxu0 0.0
        %946 = vmatpush1.msra.mxu0 0.0
        %947 = vmatprep.subr.mxu0 0.0
        %948 = vmatpush1.msra.mxu0 0.0
        %949 = vmatprep.subr.mxu0 0.0
        %950 = vmatpush1.msra.mxu0 0.0
        %951 = vmatprep.subr.mxu0 0.0
        %952 = vmatpush1.msra.mxu0 0.0
        %953 = vmatprep.subr.mxu0 0.0
        %954 = vmatpush1.msra.mxu0 0.0
        %955 = vmatprep.subr.mxu0 0.0
        %956 = vmatpush1.msra.mxu0 0.0
        %957 = vmatprep.subr.mxu0 0.0
        %958 = vmatpush1.msra.mxu0 0.0
        %959 = vmatprep.subr.mxu0 0.0
        %960 = vmatpush1.msra.mxu0 0.0
        %961 = vmatprep.subr.mxu0 0.0
        %962 = vmatpush1.msra.mxu0 0.0
        %963 = vmatprep.subr.mxu0 0.0
        %964 = vmatpush1.msra.mxu0 0.0
        %965 = vmatprep.subr.mxu0 0.0
        %966 = vmatpush1.msra.mxu0 0.0
        %967 = vmatprep.mubr.f32.mxu0 0.0
        %968 = vmatmul.mubr.f32.gmra.mrb[0].mxu0 %v259
        %v969 = vpop.f32.mrb[0].mxu0
        %v970 = vadd.f32 0.0, %v969
        %v971 = vpop.f32.mrb[0].mxu0
        %972 = vmatprep.mubr.f32.mxu0 0.0
        %973 = vmatmul.mubr.f32.gmra.mrb[0].mxu0 %v262
        %v974 = vpop.f32.mrb[0].mxu0
        %v975 = vadd.f32 0.0, %v974
        %v976 = vpop.f32.mrb[0].mxu0
        %977 = vdwg.mxu0
        %978 = vmatprep.subr.mxu0 0.0
        %979 = vmatpush1.msra.mxu0 %v795
        %980 = vmatprep.subr.mxu0 0.0
        %981 = vmatpush1.msra.mxu0 %v796
        %982 = vmatprep.subr.mxu0 0.0
        %983 = vmatpush1.msra.mxu0 %v797
        %984 = vmatprep.subr.mxu0 0.0
        %985 = vmatpush1.msra.mxu0 %v798
        %986 = vmatprep.subr.mxu0 0.0
        %987 = vmatpush1.msra.mxu0 %v799
        %988 = vmatprep.subr.mxu0 0.0
        %989 = vmatpush1.msra.mxu0 %v800
        %990 = vmatprep.subr.mxu0 0.0
        %991 = vmatpush1.msra.mxu0 %v801
        %992 = vmatprep.subr.mxu0 0.0
        %993 = vmatpush1.msra.mxu0 %v802
        %994 = vmatprep.subr.mxu0 0.0
        %995 = vmatpush1.msra.mxu0 %v803
        %996 = vmatprep.subr.mxu0 0.0
        %997 = vmatpush1.msra.mxu0 %v804
        %998 = vmatprep.subr.mxu0 0.0
        %999 = vmatpush1.msra.mxu0 %v805
        %1000 = vmatprep.subr.mxu0 0.0
        %1001 = vmatpush1.msra.mxu0 %v806
        %1002 = vmatprep.subr.mxu0 0.0
        %1003 = vmatpush1.msra.mxu0 %v807
        %1004 = vmatprep.subr.mxu0 0.0
        %1005 = vmatpush1.msra.mxu0 %v808
        %1006 = vmatprep.subr.mxu0 0.0
        %1007 = vmatpush1.msra.mxu0 %v809
        %1008 = vmatprep.subr.mxu0 0.0
        %1009 = vmatpush1.msra.mxu0 %v810
        %1010 = vmatprep.subr.mxu0 0.0
        %1011 = vmatpush1.msra.mxu0 0.0
        %1012 = vmatprep.subr.mxu0 0.0
        %1013 = vmatpush1.msra.mxu0 0.0
        %1014 = vmatprep.subr.mxu0 0.0
        %1015 = vmatpush1.msra.mxu0 0.0
        %1016 = vmatprep.subr.mxu0 0.0
        %1017 = vmatpush1.msra.mxu0 0.0
        %1018 = vmatprep.subr.mxu0 0.0
        %1019 = vmatpush1.msra.mxu0 0.0
        %1020 = vmatprep.subr.mxu0 0.0
        %1021 = vmatpush1.msra.mxu0 0.0
        %1022 = vmatprep.subr.mxu0 0.0
        %1023 = vmatpush1.msra.mxu0 0.0
        %1024 = vmatprep.subr.mxu0 0.0
        %1025 = vmatpush1.msra.mxu0 0.0
        %1026 = vmatprep.subr.mxu0 0.0
        %1027 = vmatpush1.msra.mxu0 0.0
        %1028 = vmatprep.subr.mxu0 0.0
        %1029 = vmatpush1.msra.mxu0 0.0
        %1030 = vmatprep.subr.mxu0 0.0
        %1031 = vmatpush1.msra.mxu0 0.0
        %1032 = vmatprep.subr.mxu0 0.0
        %1033 = vmatpush1.msra.mxu0 0.0
        %1034 = vmatprep.subr.mxu0 0.0
        %1035 = vmatpush1.msra.mxu0 0.0
        %1036 = vmatprep.subr.mxu0 0.0
        %1037 = vmatpush1.msra.mxu0 0.0
        %1038 = vmatprep.subr.mxu0 0.0
        %1039 = vmatpush1.msra.mxu0 0.0
        %1040 = vmatprep.subr.mxu0 0.0
        %1041 = vmatpush1.msra.mxu0 0.0
        %1042 = vmatprep.mubr.f32.mxu0 0.0
        %1043 = vmatmul.mubr.f32.gmra.mrb[0].mxu0 %v701
        %v1044 = vpop.f32.mrb[0].mxu0
        %v1045 = vadd.f32 %v970, %v1044
        %v1046 = vpop.f32.mrb[0].mxu0
        %1047 = vmatprep.mubr.f32.mxu0 0.0
        %1048 = vmatmul.mubr.f32.gmra.mrb[0].mxu0 %v702
        %v1049 = vpop.f32.mrb[0].mxu0
        %v1050 = vadd.f32 %v975, %v1049
        %v1051 = vpop.f32.mrb[0].mxu0
        %1052 = vdwg.mxu0
        %1053 = vmatprep.subr.mxu0 0.0
        %1054 = vmatpush1.msra.mxu0 %v895
        %1055 = vmatprep.subr.mxu0 0.0
        %1056 = vmatpush1.msra.mxu0 %v900
        %1057 = vmatprep.subr.mxu0 0.0
        %1058 = vmatpush1.msra.mxu0 0.0
        %1059 = vmatprep.subr.mxu0 0.0
        %1060 = vmatpush1.msra.mxu0 0.0
        %1061 = vmatprep.subr.mxu0 0.0
        %1062 = vmatpush1.msra.mxu0 0.0
        %1063 = vmatprep.subr.mxu0 0.0
        %1064 = vmatpush1.msra.mxu0 0.0
        %1065 = vmatprep.subr.mxu0 0.0
        %1066 = vmatpush1.msra.mxu0 0.0
        %1067 = vmatprep.subr.mxu0 0.0
        %1068 = vmatpush1.msra.mxu0 0.0
        %1069 = vmatprep.subr.mxu0 0.0
        %1070 = vmatpush1.msra.mxu0 0.0
        %1071 = vmatprep.subr.mxu0 0.0
        %1072 = vmatpush1.msra.mxu0 0.0
        %1073 = vmatprep.subr.mxu0 0.0
        %1074 = vmatpush1.msra.mxu0 0.0
        %1075 = vmatprep.subr.mxu0 0.0
        %1076 = vmatpush1.msra.mxu0 0.0
        %1077 = vmatprep.subr.mxu0 0.0
        %1078 = vmatpush1.msra.mxu0 0.0
        %1079 = vmatprep.subr.mxu0 0.0
        %1080 = vmatpush1.msra.mxu0 0.0
        %1081 = vmatprep.subr.mxu0 0.0
        %1082 = vmatpush1.msra.mxu0 0.0
        %1083 = vmatprep.subr.mxu0 0.0
        %1084 = vmatpush1.msra.mxu0 0.0
        %1085 = vmatprep.subr.mxu0 0.0
        %1086 = vmatpush1.msra.mxu0 0.0
        %1087 = vmatprep.subr.mxu0 0.0
        %1088 = vmatpush1.msra.mxu0 0.0
        %1089 = vmatprep.subr.mxu0 0.0
        %1090 = vmatpush1.msra.mxu0 0.0
        %1091 = vmatprep.subr.mxu0 0.0
        %1092 = vmatpush1.msra.mxu0 0.0
        %1093 = vmatprep.subr.mxu0 0.0
        %1094 = vmatpush1.msra.mxu0 0.0
        %1095 = vmatprep.subr.mxu0 0.0
        %1096 = vmatpush1.msra.mxu0 0.0
        %1097 = vmatprep.subr.mxu0 0.0
        %1098 = vmatpush1.msra.mxu0 0.0
        %1099 = vmatprep.subr.mxu0 0.0
        %1100 = vmatpush1.msra.mxu0 0.0
        %1101 = vmatprep.subr.mxu0 0.0
        %1102 = vmatpush1.msra.mxu0 0.0
        %1103 = vmatprep.subr.mxu0 0.0
        %1104 = vmatpush1.msra.mxu0 0.0
        %1105 = vmatprep.subr.mxu0 0.0
        %1106 = vmatpush1.msra.mxu0 0.0
        %1107 = vmatprep.subr.mxu0 0.0
        %1108 = vmatpush1.msra.mxu0 0.0
        %1109 = vmatprep.subr.mxu0 0.0
        %1110 = vmatpush1.msra.mxu0 0.0
        %1111 = vmatprep.subr.mxu0 0.0
        %1112 = vmatpush1.msra.mxu0 0.0
        %1113 = vmatprep.subr.mxu0 0.0
        %1114 = vmatpush1.msra.mxu0 0.0
        %1115 = vmatprep.subr.mxu0 0.0
        %1116 = vmatpush1.msra.mxu0 0.0
        %1117 = vmatprep.mubr.f32.mxu0 0.0
        %1118 = vmatmul.mubr.f32.gmra.mrb[0].mxu0 %v340
        %v1119 = vpop.f32.mrb[0].mxu0
        %v1120 = vadd.f32 0.0, %v1119
        %v1121 = vpop.f32.mrb[0].mxu0
        %1122 = vmatprep.mubr.f32.mxu0 0.0
        %1123 = vmatmul.mubr.f32.gmra.mrb[0].mxu0 %v343
        %v1124 = vpop.f32.mrb[0].mxu0
        %v1125 = vadd.f32 0.0, %v1124
        %v1126 = vpop.f32.mrb[0].mxu0
        %1127 = vdwg.mxu0
        %v1128 = vadd.f32 %v1045, %v1120
        %v1129 = vadd.f32 %v1050, %v1125
        %v1130 = vld [vmem:[%s4] sm:$0x1]
        %v1132 = vlaneseq
        %v1133 = vshrl.u32 %v1132, 7
        %v1134 = vsub.s32 0, %v1133
        %v1135 = vrot.slane %v1130, %v1134
        %v1137 = vadd.f32 %v1128, %v1135
        %v1138 = vadd.f32 %v1129, %v1135
        %v1139 = vmax.f32 %v1137, 0.0
        %v1140 = vmax.f32 %v1138, 0.0
        %1141 = vst.msk [vmem:[%s244] sm:$0xff] %vm437, %v1139
        %1142 = vst.msk [vmem:[%s244 + $0x8] sm:$0xff] %vm437, %v1140
        %s1143 = sand.u32 %s159, 1
        %s1144 = scalar_lea.sflag [#allocation3], %s1143
        %s1145 = sand.u32 %s159, 1
        %s1146 = smul.addr %s1145, 16
        %s1147 = scalar_lea.vmem [#allocation2], %s1146
        // Predicated region
        $region45: #{tpu_custom_call.1} parent=43 // pred_check
          %p1148 = pneg %p169
        $region46: #{tpu_custom_call.1} parent=43 // pred_check_branch
          %1150 = sbr.rel (%p1148) target = $region48
        $region47: #{tpu_custom_call.1} parent=43 // pred_region
          %s1152 = ssub.s32 256, 256
          %1153 = vsyncadd %s1144, %s1152
          %s1154 = smul.addr %s20, 2
          %s1155 = smul.addr %s1154, 128
          %s1156 = scalar_lea.hbm %s6, %s1155
          %s1157 = sshll.u32 %s1147, 4
          %s1158 = int_to_ptr.vmem [resolvable:$true] %s1157
          %1163 = dma.vmem_to_hbm [thread:$0]  %s1158, 256, %s1156, %s1144, 128, 128, 8
        $region48: #{tpu_custom_call.1} parent=43 // pred_fallthru
          _
      $region44: #{tpu_custom_call.1} parent=5 // pred_fallthru
        _
      %p1164 = scmp.le.s32.totalorder 2, %s15
      // Predicated region
      $region49: #{tpu_custom_call.1} parent=5 // pred_check
        %p1165 = pneg %p1164
      $region50: #{tpu_custom_call.1} parent=5 // pred_check_branch
        %1167 = sbr.rel (%p1165) target = $region52
      $region51: #{tpu_custom_call.1} parent=5 // pred_region
        %s1168 = ssub.s32 %s15, 2
        // Predicated region
        $region53: #{tpu_custom_call.1} parent=51 // pred_check
          %p1169 = pneg %p175
        $region54: #{tpu_custom_call.1} parent=51 // pred_check_branch
          %1171 = sbr.rel (%p1169) target = $region56
        $region55: #{tpu_custom_call.1} parent=51 // pred_region
          %s1172 = sand.u32 %s160, 1
          %s1173 = scalar_lea.sflag [#allocation3], %s1172
          %s1174 = sand.u32 %s160, 1
          %s1175 = smul.addr %s1174, 16
          %s1176 = scalar_lea.vmem [#allocation2], %s1175
          %1177 = dma.done %s1173, 256
        $region56: #{tpu_custom_call.1} parent=51 // pred_fallthru
          _
      $region52: #{tpu_custom_call.1} parent=5 // pred_fallthru
        _
    $region6: #{tpu_custom_call.1} parent=1 // loop_footer
      %s19 = sadd.s32 1, %s15
    $region7: #{tpu_custom_call.1} parent=1 // loop_footer_branch
      %14 = sbr.rel target = $region3
    $region8: #{tpu_custom_call.1} parent=1 // loop_exit
      _
    %1178 = vsyncpa [#allocation3], 1
    %s1179 = scalar_lea.sflag [#allocation3], 1
    %1180 = vsyncpa %s1179, 1

</llo_original>
